<compile_context>
chip_gen: v5e
topology: v5e:2x2
jax: 0.10.0
libtpu: 0.0.40
codegen_flags: <defaults>
</compile_context>

<pallas_src>
import functools

import jax
import jax.numpy as jnp
from jax.experimental import pallas as pl
from jax.experimental.pallas import tpu as pltpu


def _round_up(n, m):
    return ((n + m - 1) // m) * m


# ----------------------------------------------------------------------------
# In-kernel helpers
# ----------------------------------------------------------------------------
def _layernorm(x, g, b, eps=1e-5):
    # x: (M, D) f32, g/b: (1, D) f32
    mu = jnp.mean(x, axis=-1, keepdims=True)
    var = jnp.mean((x - mu) ** 2, axis=-1, keepdims=True)
    return (x - mu) * jax.lax.rsqrt(var + eps) * g + b


# ----------------------------------------------------------------------------
# Kernel 1: patch embedding matmul (stand-in tokenizer pipeline hot path)
#   one row-tiled (R, K_pad) @ (K_pad, D) bf16 matmul, f32 accumulate
# ----------------------------------------------------------------------------
def embed_kernel(p_ref, w_ref, b_ref, o_ref):
    o_ref[...] = (
        jnp.dot(
            p_ref[...].astype(jnp.bfloat16),
            w_ref[...],
            preferred_element_type=jnp.float32,
        )
        + b_ref[...]
    )


def patch_embed(flat, w_bf16, b):
    # flat: (R, K_pad) f32, w_bf16: (K_pad, D) bf16, b: (1, D) f32
    R, K = flat.shape
    D = w_bf16.shape[1]
    TR = 256 if R >= 256 else _round_up(R, 8)
    R_pad = _round_up(R, TR)
    if R_pad != R:
        flat = jnp.pad(flat, ((0, R_pad - R), (0, 0)))

    out = pl.pallas_call(
        embed_kernel,
        out_shape=jax.ShapeDtypeStruct((R_pad, D), jnp.float32),
        grid=(R_pad // TR,),
        in_specs=[
            pl.BlockSpec((TR, K), lambda i: (i, 0)),
            pl.BlockSpec((K, D), lambda i: (0, 0)),
            pl.BlockSpec((1, D), lambda i: (0, 0)),
        ],
        out_specs=pl.BlockSpec((TR, D), lambda i: (i, 0)),
        compiler_params=pltpu.CompilerParams(
            dimension_semantics=("parallel",),
            vmem_limit_bytes=64 * 1024 * 1024,
        ),
    )(flat, w_bf16, b)
    return out[:R]


# ----------------------------------------------------------------------------
# Kernel 2: fused encoder — all TransformerBlocks + final LayerNorm.
#   grid = (B, depth); the residual stream x is carried in the resident output
#   VMEM block across the (arbitrary) layer axis; per-layer weights stream in.
#
#   per layer (eval, tome_ratio = 0):
#     x = x + ls1 * MSA(LN1(x), amask)
#     x = x + ls2 * MLP(LN2(x))
#   after last layer: x = LN_final(x)
# ----------------------------------------------------------------------------
def encoder_kernel(
    x_ref, bias_ref,
    n1g_ref, n1b_ref, wqkv_ref, bqkv_ref, wo_ref, bo_ref, ls1_ref,
    n2g_ref, n2b_ref, w1_ref, b1_ref, w2_ref, b2_ref, ls2_ref,
    ng_ref, nb_ref,
    o_ref, *, heads,
):
    layer = pl.program_id(1)
    n_layers = pl.num_programs(1)

    # Initialize the residual stream from the input tokens at the first layer.
    @pl.when(layer == 0)
    def _init():
        o_ref[0] = x_ref[0]

    x = o_ref[0]                  # (M, D) f32 residual stream (resident in VMEM)
    bias = bias_ref[0]            # (1, M) f32 additive key mask (0 / -1e9)
    M, D = x.shape
    hd = D // heads
    scale = hd ** -0.5

    # ---- attention branch ---------------------------------------------------
    h1 = _layernorm(x, n1g_ref[0], n1b_ref[0])
    qkv = (
        jnp.dot(h1.astype(jnp.bfloat16), wqkv_ref[0],
                preferred_element_type=jnp.float32)
        + bqkv_ref[0]
    )                                                   # (M, 3D) f32
    # 128-aligned column slices (D is a multiple of 128 in the demo config).
    q = (qkv[:, :D] * scale).astype(jnp.bfloat16)
    k = qkv[:, D:2 * D].astype(jnp.bfloat16)
    v = qkv[:, 2 * D:].astype(jnp.bfloat16)

    head_outs = []
    for h in range(heads):        # static, small head count
        sl = slice(h * hd, (h + 1) * hd)
        qh = q[:, sl]
        kh = k[:, sl]
        # contract on last axes of both operands — no kh.T / XLU transpose
        s = jax.lax.dot_general(
            qh, kh, (((1,), (1,)), ((), ())),
            preferred_element_type=jnp.float32,
        )                                               # (M, M)
        s = s + bias
        s = s - jnp.max(s, axis=-1, keepdims=True)
        p = jnp.exp(s)
        p = p * pl.reciprocal(jnp.sum(p, axis=-1, keepdims=True), approx=True)
        head_outs.append(
            jnp.dot(p.astype(jnp.bfloat16), v[:, sl],
                    preferred_element_type=jnp.float32)
        )                                               # (M, hd)

    # single full-width output projection instead of per-head accumulation
    attn = jnp.concatenate(head_outs, axis=-1)          # (M, D)
    attn = (
        jnp.dot(attn.astype(jnp.bfloat16), wo_ref[0],
                preferred_element_type=jnp.float32)
        + bo_ref[0]
    )
    x = x + ls1_ref[0] * attn

    # ---- MLP branch ----------------------------------------------------------
    h2 = _layernorm(x, n2g_ref[0], n2b_ref[0])
    z = (
        jnp.dot(h2.astype(jnp.bfloat16), w1_ref[0],
                preferred_element_type=jnp.float32)
        + b1_ref[0]
    )
    z = jax.nn.gelu(z, approximate=True)  # TODO(synk): erf GELU in reference
    z = (
        jnp.dot(z.astype(jnp.bfloat16), w2_ref[0],
                preferred_element_type=jnp.float32)
        + b2_ref[0]
    )
    x = x + ls2_ref[0] * z

    # Carry the residual stream, or finalize with the output LayerNorm.
    @pl.when(layer < n_layers - 1)
    def _store():
        o_ref[0] = x

    @pl.when(layer == n_layers - 1)
    def _store_final():
        o_ref[0] = _layernorm(x, ng_ref[...], nb_ref[...])


def run_encoder(x_pad, attn_bias, p, heads):
    B, M, D = x_pad.shape
    L = p["wqkv"].shape[0]
    H = p["w1"].shape[2]

    def per_layer(*shape):
        zeros = (0,) * len(shape)
        return pl.BlockSpec((1,) + shape, lambda b, l: (l,) + zeros)

    def shared(*shape):
        zeros = (0,) * len(shape)
        return pl.BlockSpec(shape, lambda b, l: zeros)

    in_specs = [
        pl.BlockSpec((1, M, D), lambda b, l: (b, 0, 0)),   # x (tokens)
        pl.BlockSpec((1, 1, M), lambda b, l: (b, 0, 0)),   # additive key mask
        per_layer(1, D), per_layer(1, D),                  # norm1 g, b
        per_layer(D, 3 * D), per_layer(1, 3 * D),          # qkv W (bf16), b
        per_layer(D, D), per_layer(1, D), per_layer(1, D), # proj W (bf16), b, ls1
        per_layer(1, D), per_layer(1, D),                  # norm2 g, b
        per_layer(D, H), per_layer(1, H),                  # fc1 W (bf16), b
        per_layer(H, D), per_layer(1, D), per_layer(1, D), # fc2 W (bf16), b, ls2
        shared(1, D), shared(1, D),                        # final norm g, b
    ]

    return pl.pallas_call(
        functools.partial(encoder_kernel, heads=heads),
        out_shape=jax.ShapeDtypeStruct((B, M, D), jnp.float32),
        grid=(B, L),
        in_specs=in_specs,
        out_specs=pl.BlockSpec((1, M, D), lambda b, l: (b, 0, 0)),
        compiler_params=pltpu.CompilerParams(
            dimension_semantics=("parallel", "arbitrary"),
            vmem_limit_bytes=64 * 1024 * 1024,
        ),
    )(
        x_pad, attn_bias,
        p["n1g"], p["n1b"], p["wqkv"], p["bqkv"], p["wo"], p["bo"], p["ls1"],
        p["n2g"], p["n2b"], p["w1"], p["b1"], p["w2"], p["b2"], p["ls2"],
        p["ng"], p["nb"],
    )


# ----------------------------------------------------------------------------
# Glue: patchify (NCHW -> [B, P, C*ps*ps]) and full encoder forward
# ----------------------------------------------------------------------------
def patchify(img, ps):
    B, C, H, W = img.shape
    x = img.reshape(B, C, H // ps, ps, W // ps, ps)
    x = x.transpose(0, 2, 4, 1, 3, 5)
    return x.reshape(B, (H // ps) * (W // ps), C * ps * ps)


def dpx_encoder_forward(img, params, *, patch_size, heads):
    B = img.shape[0]
    D = params["pos"].shape[-1]

    # --- tokenizer-pipeline stand-in: patchify + linear embed (Pallas) ------
    patches = patchify(img, patch_size)                    # (B, P, K)
    _, P, K = patches.shape
    flat = patches.reshape(B * P, K)

    K_pad = _round_up(K, 128)                              # lane-dense contraction
    flat = jnp.pad(flat, ((0, 0), (0, K_pad - K)))
    w = jnp.pad(params["w_embed"], ((0, K_pad - K), (0, 0))).astype(jnp.bfloat16)
    tok = patch_embed(flat, w, params["b_embed"]).reshape(B, P, D)

    cls = jnp.broadcast_to(params["cls"], (B,) + params["cls"].shape[1:])
    x = jnp.concatenate([cls, tok], axis=1) + params["pos"]  # (B, M, D)
    M = x.shape[1]

    # --- pad token axis to a sublane multiple; build additive key mask ------
    M_pad = _round_up(M, 8)
    x = jnp.pad(x, ((0, 0), (0, M_pad - M), (0, 0)))
    key_valid = (jnp.arange(M_pad) < M).astype(jnp.float32)
    attn_bias = jnp.broadcast_to(
        ((key_valid - 1.0) * 1e9).reshape(1, 1, M_pad), (B, 1, M_pad)
    )  # 0 for real keys, -1e9 for pad keys (precomputed once, reused per layer)

    # --- fused transformer blocks + final LayerNorm (one pallas_call) --------
    x = run_encoder(x, attn_bias, params, heads)           # (B, M_pad, D)
    x = x[:, :M, :]                                        # drop pad rows

    seg = jnp.zeros((B, M), dtype=jnp.int32)
    amask = jnp.ones((B, M), dtype=jnp.float32)
    return x, seg, amask                                   # DPXResult fields


# ----------------------------------------------------------------------------
# Deterministic parameter construction (per-layer params stacked on axis 0)
# ----------------------------------------------------------------------------
def init_params(key, *, depth, D, hidden, K, num_cls, P, init_scale=0.1):
    def nrm(k, shape, s=0.02):
        return (s * jax.random.normal(k, shape)).astype(jnp.float32)

    ks = jax.random.split(key, 8)
    return {
        "w_embed": nrm(ks[0], (K, D)),
        "b_embed": jnp.zeros((1, D), jnp.float32),
        "cls": nrm(ks[1], (1, num_cls, D)),
        "pos": nrm(ks[2], (1, num_cls + P, D)),
        "ng": jnp.ones((1, D), jnp.float32),
        "nb": jnp.zeros((1, D), jnp.float32),
        # per-layer stacks (leading axis = depth); matmul weights in bf16
        "n1g": jnp.ones((depth, 1, D), jnp.float32),
        "n1b": jnp.zeros((depth, 1, D), jnp.float32),
        "wqkv": nrm(ks[3], (depth, D, 3 * D)).astype(jnp.bfloat16),
        "bqkv": jnp.zeros((depth, 1, 3 * D), jnp.float32),
        "wo": nrm(ks[4], (depth, D, D)).astype(jnp.bfloat16),
        "bo": jnp.zeros((depth, 1, D), jnp.float32),
        "ls1": jnp.full((depth, 1, D), init_scale, jnp.float32),
        "n2g": jnp.ones((depth, 1, D), jnp.float32),
        "n2b": jnp.zeros((depth, 1, D), jnp.float32),
        "w1": nrm(ks[5], (depth, D, hidden)).astype(jnp.bfloat16),
        "b1": jnp.zeros((depth, 1, hidden), jnp.float32),
        "w2": nrm(ks[6], (depth, hidden, D)).astype(jnp.bfloat16),
        "b2": jnp.zeros((depth, 1, D), jnp.float32),
        "ls2": jnp.full((depth, 1, D), init_scale, jnp.float32),
    }


# ----------------------------------------------------------------------------
if __name__ == "__main__":
    # Small synthetic config consistent with DPXEncoder(__init__); embed_dim
    # chosen lane-dense (128) so all activation/weight last dims are multiples
    # of 128.
    B, C, HW = 2, 3, 16
    patch_size = 4
    embed_dim, heads, depth = 128, 4, 2
    mlp_ratio = 4.0
    num_cls_tokens = 1

    P = (HW // patch_size) ** 2                  # 16 patches
    K = C * patch_size * patch_size              # 48 features per patch
    hidden = int(embed_dim * mlp_ratio)          # 512

    key = jax.random.PRNGKey(0)
    k_img, k_par = jax.random.split(key)
    img = jax.random.normal(k_img, (B, C, HW, HW), dtype=jnp.float32)  # NCHW

    params = init_params(
        k_par, depth=depth, D=embed_dim, hidden=hidden, K=K,
        num_cls=num_cls_tokens, P=P,
    )

    x, seg, amask = dpx_encoder_forward(
        img, params, patch_size=patch_size, heads=heads
    )
    jax.block_until_ready(x)
    assert x.shape == (B, num_cls_tokens + P, embed_dim)
    assert bool(jnp.all(jnp.isfinite(x)))
    print("KERNEL_OK")
</pallas_src>

<mosaic_0001>
module attributes {stable_mosaic.version = 11 : i64} {
  func.func @embed_kernel(%arg0: i32, %arg1: memref<32x128xf32, #tpu.memory_space<vmem>>, %arg2: memref<128x128xbf16, #tpu.memory_space<vmem>>, %arg3: memref<1x128xf32, #tpu.memory_space<vmem>>, %arg4: memref<32x128xf32, #tpu.memory_space<vmem>>) attributes {dimension_semantics = [#tpu.dimension_semantics<parallel>], iteration_bounds = array<i64: 1>, scalar_prefetch = 0 : i64, scratch_operands = 0 : i64, tpu.core_type = #tpu.core_type<tc>, window_params = [{transform_indices = @transform_0, window_bounds = array<i64: 32, 128>}, {pipeline_mode = #tpu.pipeline_mode<synchronous>, transform_indices = @transform_1, window_bounds = array<i64: 128, 128>}, {pipeline_mode = #tpu.pipeline_mode<synchronous>, transform_indices = @transform_2, window_bounds = array<i64: 1, 128>}, {transform_indices = @transform_3, window_bounds = array<i64: 32, 128>}]} {
    %c0 = arith.constant 0 : index
    %c0_0 = arith.constant 0 : index
    %0 = vector.load %arg1[%c0, %c0_0] : memref<32x128xf32, #tpu.memory_space<vmem>>, vector<32x128xf32>
    %1 = arith.truncf %0 : vector<32x128xf32> to vector<32x128xbf16>
    %c0_1 = arith.constant 0 : index
    %c0_2 = arith.constant 0 : index
    %2 = vector.load %arg2[%c0_1, %c0_2] : memref<128x128xbf16, #tpu.memory_space<vmem>>, vector<128x128xbf16>
    %cst = arith.constant dense<0.000000e+00> : vector<32x128xf32>
    %3 = tpu.matmul %1, %2, %cst {dimension_numbers = #tpu.dot_dimension_numbers<[1], [0], [0], [1], [0, 0, 1, 1], [], []>} : vector<32x128xbf16>, vector<128x128xbf16>, vector<32x128xf32> -> vector<32x128xf32>
    %c0_3 = arith.constant 0 : index
    %c0_4 = arith.constant 0 : index
    %4 = vector.load %arg3[%c0_3, %c0_4] : memref<1x128xf32, #tpu.memory_space<vmem>>, vector<1x128xf32>
    %5 = vector.broadcast %4 : vector<1x128xf32> to vector<32x128xf32>
    %6 = arith.addf %3, %5 : vector<32x128xf32>
    %c0_5 = arith.constant 0 : index
    %c0_6 = arith.constant 0 : index
    %7 = vector.load %arg4[%c0_5, %c0_6] : memref<32x128xf32, #tpu.memory_space<vmem>>, vector<32x128xf32>
    tpu.vector_store %arg4[%c0_5, %c0_6], %6 {strides = array<i32>} : memref<32x128xf32, #tpu.memory_space<vmem>>, vector<32x128xf32>,
    return
  }
  func.func @transform_0(%arg0: i32) -> (i32, i32) {
    %c0_i32 = arith.constant 0 : i32
    %c0_i32_0 = arith.constant 0 : i32
    return %arg0, %c0_i32 : i32, i32
  }
  func.func @transform_1(%arg0: i32) -> (i32, i32) {
    %c0_i32 = arith.constant 0 : i32
    %c0_i32_0 = arith.constant 0 : i32
    %c0_i32_1 = arith.constant 0 : i32
    return %c0_i32, %c0_i32_0 : i32, i32
  }
  func.func @transform_2(%arg0: i32) -> (i32, i32) {
    %c0_i32 = arith.constant 0 : i32
    %c0_i32_0 = arith.constant 0 : i32
    %c0_i32_1 = arith.constant 0 : i32
    return %c0_i32, %c0_i32_0 : i32, i32
  }
  func.func @transform_3(%arg0: i32) -> (i32, i32) {
    %c0_i32 = arith.constant 0 : i32
    %c0_i32_0 = arith.constant 0 : i32
    return %arg0, %c0_i32 : i32, i32
  }
}

</mosaic_0001>

<llo_original>
// kernel: tpu_custom_call.1
$region0: #{tpu_custom_call.1}
  #allocation0 [shape = 'u32[]', space=smem, size = 0x4, offset = 0x4, fixed_abs, tag = 'smem constant byte address 0x4 - core index']
  #allocation1 [shape = 'u32[72,128]{1,0:T(1,128)}', space=vmem, size = 0x9000, scoped, tag = 'internal scratch']
  %s0 = inlined_call_operand.hbm [shape: f32[32,128], index: 0, kind: input, shape index: {}]
  %s1 = inlined_call_operand.hbm [shape: bf16[128,128], index: 1, kind: input, shape index: {}]
  %s2 = inlined_call_operand.vmem [shape: f32[1,128], index: 2, kind: input, shape index: {}]
  %s3 = inlined_call_operand.hbm [shape: f32[32,128], index: 3, kind: output, shape index: {}]
  %s4 = sld [smem:[#allocation0]]
  $region30: #{tpu_custom_call.1} parent=0
    _
  %s6 = ssub.s32 1, %s4
  %s7 = scalar_select 0, %s6, %s4
  $region1: #{tpu_custom_call.1} parent=0
    #allocation2 [shape = 'u8[16384]{0}', space=vmem, size = 0x4000, scoped, tag = 'input window, operand 0, single buffered']
    #allocation3 [shape = 's32[1]{0}', space=sflag, size = 0x4, scoped, tag = 'scoped memory for tpu_custom_call.1']
    #allocation4 [shape = 's32[1]{0}', space=sflag, size = 0x4, scoped, tag = 'scoped memory for tpu_custom_call.1']
    #allocation5 [shape = 'u8[32768]{0}', space=vmem, size = 0x8000, scoped, tag = 'input window, operand 1, single buffered']
    #allocation6 [shape = 's32[1]{0}', space=sflag, size = 0x4, scoped, tag = 'scoped memory for tpu_custom_call.1']
    #allocation7 [shape = 'u8[16384]{0}', space=vmem, size = 0x4000, scoped, tag = 'output window, operand 0, single buffered']
    %8 = vsyncpa [#allocation3], 0
    %9 = vsyncpa [#allocation6], 0
    %10 = vsyncpa [#allocation4], 0
    // Predicated region
    $region2: #{tpu_custom_call.1} parent=1 // pred_check
      _
    $region3: #{tpu_custom_call.1} parent=1 // pred_check_branch
      %12 = sbr.rel (0) target = $region5
    $region4: #{tpu_custom_call.1} parent=1 // pred_region
      %14 = vsyncadd [#allocation3], 0
      %s15 = sshll.u32 %s0, 4
      %s16 = int_to_ptr.hbm [resolvable:$true] %s15
      %s17 = sshll.u32 [#allocation2], 4
      %s18 = int_to_ptr.vmem [resolvable:$true] %s17
      %23 = dma.hbm_to_vmem [thread:$0]  %s16, 512, %s18, [#allocation3], 128, 128, 8
    $region5: #{tpu_custom_call.1} parent=1 // pred_fallthru
      _
    // Predicated region
    $region6: #{tpu_custom_call.1} parent=1 // pred_check
      _
    $region7: #{tpu_custom_call.1} parent=1 // pred_check_branch
      %25 = sbr.rel (0) target = $region9
    $region8: #{tpu_custom_call.1} parent=1 // pred_region
      %27 = vsyncadd [#allocation6], 0
      %s28 = sshll.u32 %s1, 4
      %s29 = int_to_ptr.hbm [resolvable:$true] %s28
      %s30 = sshll.u32 [#allocation5], 4
      %s31 = int_to_ptr.vmem [resolvable:$true] %s30
      %36 = dma.hbm_to_vmem [thread:$0]  %s29, 1024, %s31, [#allocation6], 64, 64, 4
    $region9: #{tpu_custom_call.1} parent=1 // pred_fallthru
      _
    // Predicated region
    $region10: #{tpu_custom_call.1} parent=1 // pred_check
      _
    $region11: #{tpu_custom_call.1} parent=1 // pred_check_branch
      %38 = sbr.rel (0) target = $region13
    $region12: #{tpu_custom_call.1} parent=1 // pred_region
      _
    $region13: #{tpu_custom_call.1} parent=1 // pred_fallthru
      _
    // Predicated region
    $region14: #{tpu_custom_call.1} parent=1 // pred_check
      _
    $region15: #{tpu_custom_call.1} parent=1 // pred_check_branch
      %40 = sbr.rel (0) target = $region17
    $region16: #{tpu_custom_call.1} parent=1 // pred_region
      %42 = dma.done [#allocation3], 512
    $region17: #{tpu_custom_call.1} parent=1 // pred_fallthru
      _
    // Predicated region
    $region18: #{tpu_custom_call.1} parent=1 // pred_check
      _
    $region19: #{tpu_custom_call.1} parent=1 // pred_check_branch
      %44 = sbr.rel (0) target = $region21
    $region20: #{tpu_custom_call.1} parent=1 // pred_region
      %46 = dma.done [#allocation6], 1024
    $region21: #{tpu_custom_call.1} parent=1 // pred_fallthru
      _
    %v47 = vld [vmem:[#allocation2] sm:$0xff]
    %v48 = vld [vmem:[#allocation2 + $0x8] sm:$0xff]
    %v49 = vld [vmem:[#allocation2 + $0x10] sm:$0xff]
    %v50 = vld [vmem:[#allocation2 + $0x18] sm:$0xff]
    %v51 = vpack.c.bf16 %v48, %v47
    %v52 = vpack.c.bf16 %v50, %v49
    %v53 = vld [vmem:[#allocation5] sm:$0xf]
    %v54 = vld [vmem:[#allocation5 + $0x4] sm:$0xf]
    %v55 = vld [vmem:[#allocation5 + $0x8] sm:$0xf]
    %v56 = vld [vmem:[#allocation5 + $0xc] sm:$0xf]
    %v57 = vld [vmem:[#allocation5 + $0x10] sm:$0xf]
    %v58 = vld [vmem:[#allocation5 + $0x14] sm:$0xf]
    %v59 = vld [vmem:[#allocation5 + $0x18] sm:$0xf]
    %v60 = vld [vmem:[#allocation5 + $0x1c] sm:$0xf]
    %v61 = vld [vmem:[#allocation5 + $0x20] sm:$0xf]
    %v62 = vld [vmem:[#allocation5 + $0x24] sm:$0xf]
    %v63 = vld [vmem:[#allocation5 + $0x28] sm:$0xf]
    %v64 = vld [vmem:[#allocation5 + $0x2c] sm:$0xf]
    %v65 = vld [vmem:[#allocation5 + $0x30] sm:$0xf]
    %v66 = vld [vmem:[#allocation5 + $0x34] sm:$0xf]
    %v67 = vld [vmem:[#allocation5 + $0x38] sm:$0xf]
    %v68 = vld [vmem:[#allocation5 + $0x3c] sm:$0xf]
    %v69 = vld [vmem:[%s2] sm:$0x1]
    %v71 = vperm.slane %v69, 0
    %v89 = vunpack.c.l.b16 %v53
    %v90 = vunpack.c.l.b16 %v54
    %v91 = vunpack.c.l.b16 %v55
    %v92 = vunpack.c.l.b16 %v56
    %v93 = vunpack.c.l.b16 %v57
    %v94 = vunpack.c.l.b16 %v58
    %v95 = vunpack.c.l.b16 %v59
    %v96 = vunpack.c.l.b16 %v60
    %v97 = vunpack.c.l.b16 %v61
    %v98 = vunpack.c.l.b16 %v62
    %v99 = vunpack.c.l.b16 %v63
    %v100 = vunpack.c.l.b16 %v64
    %v101 = vunpack.c.l.b16 %v65
    %v102 = vunpack.c.l.b16 %v66
    %v103 = vunpack.c.l.b16 %v67
    %v104 = vunpack.c.l.b16 %v68
    %v105 = vpack.c.b16 %v90, %v89
    %v106 = vpack.c.b16 %v92, %v91
    %v107 = vpack.c.b16 %v94, %v93
    %v108 = vpack.c.b16 %v96, %v95
    %v109 = vpack.c.b16 %v98, %v97
    %v110 = vpack.c.b16 %v100, %v99
    %v111 = vpack.c.b16 %v102, %v101
    %v112 = vpack.c.b16 %v104, %v103
    %121 = vmatpush.bf16.msra.mxu0 %v112
    %122 = vmatpush.bf16.msra.mxu0 %v111
    %123 = vmatpush.bf16.msra.mxu0 %v110
    %124 = vmatpush.bf16.msra.mxu0 %v109
    %125 = vmatpush.bf16.msra.mxu0 %v108
    %126 = vmatpush.bf16.msra.mxu0 %v107
    %127 = vmatpush.bf16.msra.mxu0 %v106
    %128 = vmatpush.bf16.msra.mxu0 %v105
    %129 = vmatmul.bf16.gmra.mxu0 %v51
    %v130 = vpop.f32.mrf.mxu0
    %v131 = vadd.f32 %v71, %v130
    %v132 = vpop.f32.mrf.mxu0
    %v133 = vadd.f32 %v71, %v132
    %134 = vmatmul.bf16.gmra.mxu0 %v52
    %v135 = vpop.f32.mrf.mxu0
    %v136 = vadd.f32 %v71, %v135
    %v137 = vpop.f32.mrf.mxu0
    %v138 = vadd.f32 %v71, %v137
    %139 = vdwg.mxu0
    %140 = vst [vmem:[#allocation7] sm:$0xff] %v131
    %141 = vst [vmem:[#allocation7 + $0x8] sm:$0xff] %v133
    %142 = vst [vmem:[#allocation7 + $0x10] sm:$0xff] %v136
    %143 = vst [vmem:[#allocation7 + $0x18] sm:$0xff] %v138
    // Predicated region
    $region22: #{tpu_custom_call.1} parent=1 // pred_check
      _
    $region23: #{tpu_custom_call.1} parent=1 // pred_check_branch
      %145 = sbr.rel (0) target = $region25
    $region24: #{tpu_custom_call.1} parent=1 // pred_region
      %147 = vsyncadd [#allocation4], 0
      %s148 = sshll.u32 [#allocation7], 4
      %s149 = int_to_ptr.vmem [resolvable:$true] %s148
      %s150 = sshll.u32 %s3, 4
      %s151 = int_to_ptr.hbm [resolvable:$true] %s150
      %156 = dma.vmem_to_hbm [thread:$0]  %s149, 512, %s151, [#allocation4], 128, 128, 8
    $region25: #{tpu_custom_call.1} parent=1 // pred_fallthru
      _
    // Predicated region
    $region26: #{tpu_custom_call.1} parent=1 // pred_check
      _
    $region27: #{tpu_custom_call.1} parent=1 // pred_check_branch
      %158 = sbr.rel (0) target = $region29
    $region28: #{tpu_custom_call.1} parent=1 // pred_region
      %160 = dma.done [#allocation4], 512
    $region29: #{tpu_custom_call.1} parent=1 // pred_fallthru
      _
    %161 = vsyncpa [#allocation3], 1
    %162 = vsyncpa [#allocation6], 1
    %163 = vsyncpa [#allocation4], 1

</llo_original>
